<compile_context>
chip_gen: v5e
topology: v5e:2x2
jax: 0.10.0
libtpu: 0.0.40
codegen_flags: <defaults>
</compile_context>

<pallas_src>
import jax
import jax.numpy as jnp
import numpy as np
from jax.experimental import pallas as pl
from jax.experimental.pallas import tpu as pltpu


def _feature_mask_kernel(x_ref, drop_ref, o_ref):
    # x_ref: (tm, tn) tile of node features; drop_ref: (1, tn) int32,
    # 1 where the feature column is dropped. Pure VPU streaming op.
    x = x_ref[...]
    o_ref[...] = jnp.where(drop_ref[...] != 0, jnp.zeros_like(x), x)


def _tile_sizes(n, d, itemsize, *, target_block_bytes=4 << 20, min_rows=256):
    """Pick (tm, tn): ~target_block_bytes per input block, sublane/lane aligned,
    with >=2 row steps when n allows (v7x megacore)."""
    sublane = max(8, 32 // itemsize)   # 8 for f32, 16 for bf16, 32 for int8/fp8
    lane = 128

    # Column tile: full width unless a min_rows-tall full-width slab blows the
    # per-block budget (very wide feature matrices).
    if d <= lane or d * itemsize * min_rows <= target_block_bytes:
        tn = d
    else:
        tn = (target_block_bytes // (min_rows * itemsize)) // lane * lane
        tn = int(max(lane, min(tn, (d // lane) * lane)))

    # Row tile: fill the byte budget.
    tm = target_block_bytes // (tn * itemsize)
    tm = int(max(sublane, (tm // sublane) * sublane))

    # Keep >=2 row steps so the "parallel" row axis can shard across both
    # TensorCores on v7x (only binds for small n, where tiles are cheap anyway).
    if n > 2 * sublane:
        half_rows = (n + 1) // 2
        half_rows = -(-half_rows // sublane) * sublane
        tm = min(tm, half_rows)

    # Never larger than the sublane-rounded row count.
    n_ceil = -(-n // sublane) * sublane
    tm = int(max(sublane, min(tm, n_ceil)))
    return tm, tn


def node_feature_masking_all(x, y, edge_index, train_mask, test_mask,
                             val_mask, feat_drop_mask):
    """Pallas port of NodeFeatureMasking_all.forward.

    Zeroes feature columns selected by `feat_drop_mask` (bool, shape (d,)) and
    passes graph metadata through untouched. Returns
    (x_masked, y, edge_index, train_mask, test_mask, val_mask)."""
    n, d = x.shape
    itemsize = jnp.dtype(x.dtype).itemsize
    tm, tn = _tile_sizes(n, d, itemsize)

    grid = (pl.cdiv(n, tm), pl.cdiv(d, tn))

    # Column drop mask as an int32 row vector; kernel compares against 0.
    drop = feat_drop_mask.astype(jnp.int32).reshape(1, d)

    grid_spec = pltpu.PrefetchScalarGridSpec(
        num_scalar_prefetch=0,
        grid=grid,
        in_specs=[
            pl.BlockSpec((tm, tn), lambda i, j: (i, j)),   # streaming x tile
            pl.BlockSpec((1, tn), lambda i, j: (0, j)),    # same drop vec each row step
        ],
        out_specs=pl.BlockSpec((tm, tn), lambda i, j: (i, j)),
    )

    x_masked = pl.pallas_call(
        _feature_mask_kernel,
        out_shape=jax.ShapeDtypeStruct((n, d), x.dtype),
        grid_spec=grid_spec,
        # In-place when x is donated by the caller; XLA copies otherwise.
        input_output_aliases={0: 0},
        compiler_params=pltpu.CompilerParams(
            dimension_semantics=("parallel", "parallel"),
            vmem_limit_bytes=48 * 1024 * 1024,
        ),
    )(x, drop)

    return x_masked, y, edge_index, train_mask, test_mask, val_mask


if __name__ == "__main__":
    key = jax.random.PRNGKey(0)
    k_x, k_y, k_e, k_mask, k_tr = jax.random.split(key, 5)

    n, d = 200, 128          # small, lane-dense node-feature matrix
    num_classes = 7
    num_edges = 400
    p = 0.15

    x = jax.random.normal(k_x, (n, d), dtype=jnp.float32)
    y = jax.random.randint(k_y, (n,), 0, num_classes, dtype=jnp.int32)
    edge_index = jax.random.randint(k_e, (2, num_edges), 0, n, dtype=jnp.int32)
    train_mask = jax.random.bernoulli(k_tr, 0.6, (n,))
    test_mask = ~train_mask
    val_mask = jnp.zeros((n,), dtype=bool)

    # torch.empty((d,)).uniform_(0,1) < p  equivalent (different RNG stream).
    # TODO(synk): torch's exact RNG stream has no JAX equivalent; distribution matches.
    feat_drop_mask = jax.random.uniform(k_mask, (d,)) < p

    # Exercise exact `x[:, idx] = 0` semantics: place a NaN in a dropped column.
    idx_np = np.asarray(feat_drop_mask)
    if idx_np.any():
        col = int(np.argmax(idx_np))
        x = x.at[0, col].set(jnp.nan)

    # Snapshot x before the (aliased) kernel call for the reference check.
    x_np = np.asarray(x).copy()

    outs = node_feature_masking_all(
        x, y, edge_index, train_mask, test_mask, val_mask, feat_drop_mask)
    jax.block_until_ready(outs)
    x_masked, y_out, e_out, tr_out, te_out, va_out = outs

    # Pure-NumPy reference (x[:, idx] = 0).
    x_ref = x_np.copy()
    x_ref[:, idx_np] = 0.0

    assert np.array_equal(np.asarray(x_masked), x_ref)
    assert np.array_equal(np.asarray(y_out), np.asarray(y))
    assert np.array_equal(np.asarray(e_out), np.asarray(edge_index))
    assert np.array_equal(np.asarray(tr_out), np.asarray(train_mask))
    assert np.array_equal(np.asarray(te_out), np.asarray(test_mask))
    assert np.array_equal(np.asarray(va_out), np.asarray(val_mask))

    print("KERNEL_OK")
</pallas_src>

<mosaic_0001>
module attributes {stable_mosaic.version = 11 : i64} {
  func.func @_feature_mask_kernel(%arg0: i32, %arg1: i32, %arg2: memref<104x128xf32, #tpu.memory_space<vmem>>, %arg3: memref<1x128xi32, #tpu.memory_space<vmem>>, %arg4: memref<104x128xf32, #tpu.memory_space<vmem>>) attributes {dimension_semantics = [#tpu.dimension_semantics<parallel>, #tpu.dimension_semantics<parallel>], iteration_bounds = array<i64: 2, 1>, scalar_prefetch = 0 : i64, scratch_operands = 0 : i64, tpu.core_type = #tpu.core_type<tc>, window_params = [{transform_indices = @transform_0, window_bounds = array<i64: 104, 128>}, {transform_indices = @transform_1, window_bounds = array<i64: 1, 128>}, {transform_indices = @transform_2, window_bounds = array<i64: 104, 128>}]} {
    %c0 = arith.constant 0 : index
    %c0_0 = arith.constant 0 : index
    %0 = vector.load %arg2[%c0, %c0_0] : memref<104x128xf32, #tpu.memory_space<vmem>>, vector<104x128xf32>
    %c0_1 = arith.constant 0 : index
    %c0_2 = arith.constant 0 : index
    %1 = vector.load %arg3[%c0_1, %c0_2] : memref<1x128xi32, #tpu.memory_space<vmem>>, vector<1x128xi32>
    %c0_i32 = arith.constant 0 : i32
    %2 = vector.broadcast %c0_i32 : i32 to vector<1x128xi32>
    %3 = arith.cmpi ne, %1, %2 : vector<1x128xi32>
    %cst = arith.constant 0.000000e+00 : f32
    %4 = vector.broadcast %cst : f32 to vector<104x128xf32>
    %5 = vector.shape_cast %3 : vector<1x128xi1> to vector<1x128xi1>
    %6 = vector.broadcast %5 : vector<1x128xi1> to vector<104x128xi1>
    %7 = arith.select %6, %4, %0 : vector<104x128xi1>, vector<104x128xf32>
    %c0_3 = arith.constant 0 : index
    %c0_4 = arith.constant 0 : index
    %8 = vector.load %arg4[%c0_3, %c0_4] : memref<104x128xf32, #tpu.memory_space<vmem>>, vector<104x128xf32>
    tpu.vector_store %arg4[%c0_3, %c0_4], %7 {strides = array<i32>} : memref<104x128xf32, #tpu.memory_space<vmem>>, vector<104x128xf32>,
    return
  }
  func.func @transform_0(%arg0: i32, %arg1: i32) -> (i32, i32) {
    %c0_i32 = arith.constant 0 : i32
    return %arg0, %arg1 : i32, i32
  }
  func.func @transform_1(%arg0: i32, %arg1: i32) -> (i32, i32) {
    %c0_i32 = arith.constant 0 : i32
    %c0_i32_0 = arith.constant 0 : i32
    return %c0_i32, %arg1 : i32, i32
  }
  func.func @transform_2(%arg0: i32, %arg1: i32) -> (i32, i32) {
    %c0_i32 = arith.constant 0 : i32
    return %arg0, %arg1 : i32, i32
  }
}

</mosaic_0001>

<llo_original>
// kernel: tpu_custom_call.1
$region0: #{tpu_custom_call.1}
  #allocation0 [shape = 'u32[]', space=smem, size = 0x4, offset = 0x4, fixed_abs, tag = 'smem constant byte address 0x4 - core index']
  #allocation1 [shape = 'u32[72,128]{1,0:T(1,128)}', space=vmem, size = 0x9000, scoped, tag = 'internal scratch']
  %s0 = inlined_call_operand.hbm [shape: f32[200,128], index: 0, kind: input, shape index: {}, may-alias: {0,2}]
  %s1 = inlined_call_operand.vmem [shape: s32[1,128], index: 1, kind: input, shape index: {}]
  %s2 = inlined_call_operand.hbm [shape: f32[200,128], index: 2, kind: output, shape index: {}, may-alias: {0,2}]
  %s3 = sld [smem:[#allocation0]]
  $region45: #{tpu_custom_call.1} parent=0
    _
  %s5 = ssub.s32 1, %s3
  %s6 = scalar_select 0, %s5, %s3
  $region1: #{tpu_custom_call.1} parent=0
    #allocation2 [shape = 'u8[106496]{0}', space=vmem, size = 0x1a000, scoped, tag = 'input window, operand 0']
    #allocation3 [shape = 's32[2]{0}', space=sflag, size = 0x8, scoped, tag = 'scoped memory for tpu_custom_call.1']
    #allocation4 [shape = 's32[2]{0}', space=sflag, size = 0x8, scoped, tag = 'scoped memory for tpu_custom_call.1']
    #allocation5 [shape = 'u8[106496]{0}', space=vmem, size = 0x1a000, scoped, tag = 'output window, operand 0']
    %7 = vsyncpa [#allocation3], 0
    %s8 = scalar_lea.sflag [#allocation3], 1
    %9 = vsyncpa %s8, 0
    %10 = vsyncpa [#allocation4], 0
    %s11 = scalar_lea.sflag [#allocation4], 1
    %12 = vsyncpa %s11, 0
    loop: start=0, step=1, limit=4
    $region2: #{tpu_custom_call.1} parent=1 // loop_pre_header
      _
    $region3: #{tpu_custom_call.1} parent=1 // loop_header
      %s14 = sphi 0, %s18
      %p15 = scmp.ge.s32.totalorder %s14, 4
      %s21 = sphi 0, %s33
      %s22 = sphi 0, %s29
      %s23 = sphi 0, %s21
      %s24 = sphi 0, %s22
      %s25 = sphi 0, %s23
      %s26 = sphi 0, %s24
      %s38 = sphi 0, %s40
      %s41 = sphi 0, %s38
      %s42 = sphi 0, %s41
      %s58 = sphi 0, %s42
      %s64 = sphi 0, %s66
      %s67 = sphi 0, %s64
      %s68 = sphi 0, %s67
      %s84 = sphi 0, %s68
      %s92 = sphi 0, %s94
      %s95 = sphi 0, %s92
      %s96 = sphi 0, %s95
      %s112 = sphi 0, %s96
    $region4: #{tpu_custom_call.1} parent=1 // loop_header_branch
      %17 = sbr.rel (%p15) target = $region8
    $region5: #{tpu_custom_call.1} parent=1 // loop_body
      %s19 = ssub.s32 %s14, 1
      %s20 = ssub.s32 %s14, 2
      %s27 = sadd.s32 1, %s22
      %p28 = scmp.ge.s32.totalorder %s27, 1
      %s29 = scalar_select %p28, 0, %s27
      %s30 = sadd.s32 1, %s21
      %s31 = scalar_select %p28, %s30, %s21
      %p32 = scmp.ge.s32.totalorder %s31, 2
      %s33 = scalar_select %p32, 0, %s31
      %s34 = ssub.s32 %s21, %s33
      %s35 = ssub.s32 %s22, %s29
      %s36 = sor.u32 %s34, %s35
      %p37 = scmp.eq.s32.totalorder %s36, 0
      %s39 = sadd.s32 %s38, 1
      %s40 = scalar_select %p37, %s38, %s39
      %p43 = pneg %p37
      %p44 = scmp.eq.s32.totalorder %s14, 1
      %p45 = por %p43, %p44
      %p46 = scmp.ne.s32.totalorder %s38, %s41
      %p47 = scmp.eq.s32.totalorder %s14, 0
      %p48 = por %p46, %p47
      %p49 = scmp.ne.s32.totalorder %s38, %s41
      %p50 = scmp.eq.s32.totalorder %s19, 1
      %p51 = por %p49, %p50
      %p52 = scmp.ne.s32.totalorder %s41, %s42
      %p53 = scmp.eq.s32.totalorder %s19, 0
      %p54 = por %p52, %p53
      %p55 = scmp.ne.s32.totalorder %s41, %s42
      %p56 = scmp.eq.s32.totalorder %s20, 1
      %p57 = por %p55, %p56
      %p59 = scmp.ne.s32.totalorder %s42, %s58
      %p60 = scmp.eq.s32.totalorder %s20, 0
      %p61 = por %p59, %p60
      %s62 = ssub.s32 %s22, %s29
      %p63 = scmp.eq.s32.totalorder %s62, 0
      %s65 = sadd.s32 %s64, 1
      %s66 = scalar_select %p63, %s64, %s65
      %p69 = pneg %p63
      %p70 = scmp.eq.s32.totalorder %s14, 1
      %p71 = por %p69, %p70
      %p72 = scmp.ne.s32.totalorder %s64, %s67
      %p73 = scmp.eq.s32.totalorder %s14, 0
      %p74 = por %p72, %p73
      %p75 = scmp.ne.s32.totalorder %s64, %s67
      %p76 = scmp.eq.s32.totalorder %s19, 1
      %p77 = por %p75, %p76
      %p78 = scmp.ne.s32.totalorder %s67, %s68
      %p79 = scmp.eq.s32.totalorder %s19, 0
      %p80 = por %p78, %p79
      %p81 = scmp.ne.s32.totalorder %s67, %s68
      %p82 = scmp.eq.s32.totalorder %s20, 1
      %p83 = por %p81, %p82
      %p85 = scmp.ne.s32.totalorder %s68, %s84
      %p86 = scmp.eq.s32.totalorder %s20, 0
      %p87 = por %p85, %p86
      %s88 = ssub.s32 %s21, %s33
      %s89 = ssub.s32 %s22, %s29
      %s90 = sor.u32 %s88, %s89
      %p91 = scmp.eq.s32.totalorder %s90, 0
      %s93 = sadd.s32 %s92, 1
      %s94 = scalar_select %p91, %s92, %s93
      %p97 = pneg %p91
      %p98 = scmp.eq.s32.totalorder %s14, 1
      %p99 = por %p97, %p98
      %p100 = scmp.ne.s32.totalorder %s92, %s95
      %p101 = scmp.eq.s32.totalorder %s14, 0
      %p102 = por %p100, %p101
      %p103 = scmp.ne.s32.totalorder %s92, %s95
      %p104 = scmp.eq.s32.totalorder %s19, 1
      %p105 = por %p103, %p104
      %p106 = scmp.ne.s32.totalorder %s95, %s96
      %p107 = scmp.eq.s32.totalorder %s19, 0
      %p108 = por %p106, %p107
      %p109 = scmp.ne.s32.totalorder %s95, %s96
      %p110 = scmp.eq.s32.totalorder %s20, 1
      %p111 = por %p109, %p110
      %p113 = scmp.ne.s32.totalorder %s96, %s112
      %p114 = scmp.eq.s32.totalorder %s20, 0
      %p115 = por %p113, %p114
      %p116 = scmp.le.s32.totalorder 1, %s14
      %p117 = scmp.lt.s32.totalorder %s14, 3
      %p118 = pnand %p116, %p117
      %p119 = pneg %p118
      // Predicated region
      $region9: #{tpu_custom_call.1} parent=5 // pred_check
        _
      $region10: #{tpu_custom_call.1} parent=5 // pred_check_branch
        %121 = sbr.rel (%p118) target = $region12
      $region11: #{tpu_custom_call.1} parent=5 // pred_region
        %s122 = ssub.s32 %s14, 1
        // Predicated region
        $region13: #{tpu_custom_call.1} parent=11 // pred_check
          %p123 = pneg %p80
        $region14: #{tpu_custom_call.1} parent=11 // pred_check_branch
          %125 = sbr.rel (%p123) target = $region16
        $region15: #{tpu_custom_call.1} parent=11 // pred_region
          %p126 = scmp.lt.s32.totalorder %s24, 0
          %s127 = scalar_select %p126, %s24, 0
          %s128 = scalar_lea.vmem %s1, %s127
        $region16: #{tpu_custom_call.1} parent=11 // pred_fallthru
          _
      $region12: #{tpu_custom_call.1} parent=5 // pred_fallthru
        _
      %p129 = scmp.lt.s32.totalorder %s14, 2
      // Predicated region
      $region17: #{tpu_custom_call.1} parent=5 // pred_check
        %p130 = pneg %p129
      $region18: #{tpu_custom_call.1} parent=5 // pred_check_branch
        %132 = sbr.rel (%p130) target = $region20
      $region19: #{tpu_custom_call.1} parent=5 // pred_region
        // Predicated region
        $region21: #{tpu_custom_call.1} parent=19 // pred_check
          %p133 = pneg %p48
        $region22: #{tpu_custom_call.1} parent=19 // pred_check_branch
          %135 = sbr.rel (%p133) target = $region24
        $region23: #{tpu_custom_call.1} parent=19 // pred_region
          %s136 = sand.u32 %s38, 1
          %s137 = scalar_lea.sflag [#allocation3], %s136
          %s138 = sand.u32 %s38, 1
          %s139 = smul.addr %s138, 104
          %s140 = scalar_lea.vmem [#allocation2], %s139
          %s141 = smul.u32 13, %s21
          %s142 = ssub.s32 25, %s141
          %p143 = scmp.lt.s32.totalorder %s142, 13
          %s144 = scalar_select %p143, %s142, 13
          %s145 = smul.u32 8, %s144
          %s146 = ssub.s32 104, %s145
          %s147 = sshll.u32 %s146, 4
          %148 = vsyncadd %s137, %s147
          %p149 = scmp.ne.s32.totalorder 0, %s145
          %s150 = sadd.s32 %s22, %s141
          %s151 = smul.addr %s150, 8
          %s152 = scalar_lea.hbm %s0, %s151
          %s153 = smul.u32 8, %s144
          %s154 = sshll.u32 %s152, 4
          %s155 = int_to_ptr.hbm [resolvable:$true] %s154
          %s156 = sshll.u32 %s140, 4
          %s157 = int_to_ptr.vmem [resolvable:$true] %s156
          %s158 = sshll.u32 %s153, 4
          %162 = dma.hbm_to_vmem [thread:$0]  (%p149), %s155, %s158, %s157, %s137, 128, 128, 8
        $region24: #{tpu_custom_call.1} parent=19 // pred_fallthru
          _
      $region20: #{tpu_custom_call.1} parent=5 // pred_fallthru
        _
      %p163 = scmp.le.s32.totalorder 1, %s14
      %p164 = scmp.lt.s32.totalorder %s14, 3
      %p165 = pnand %p163, %p164
      %p166 = pneg %p165
      // Predicated region
      $region25: #{tpu_custom_call.1} parent=5 // pred_check
        _
      $region26: #{tpu_custom_call.1} parent=5 // pred_check_branch
        %168 = sbr.rel (%p165) target = $region28
      $region27: #{tpu_custom_call.1} parent=5 // pred_region
        %s169 = ssub.s32 %s14, 1
        %s170 = sand.u32 %s41, 1
        %s171 = scalar_lea.sflag [#allocation3], %s170
        %s172 = sand.u32 %s41, 1
        %s173 = smul.addr %s172, 104
        %s174 = scalar_lea.vmem [#allocation2], %s173
        // Predicated region
        $region29: #{tpu_custom_call.1} parent=27 // pred_check
          %p175 = pneg %p54
        $region30: #{tpu_custom_call.1} parent=27 // pred_check_branch
          %177 = sbr.rel (%p175) target = $region32
        $region31: #{tpu_custom_call.1} parent=27 // pred_region
          %179 = dma.done %s171, 1664
        $region32: #{tpu_custom_call.1} parent=27 // pred_fallthru
          _
        %s180 = sand.u32 %s41, 1
        %s181 = scalar_lea.sflag [#allocation3], %s180
        %s182 = sand.u32 %s41, 1
        %s183 = smul.addr %s182, 104
        %s184 = scalar_lea.vmem [#allocation2], %s183
        %p185 = pneg %p54
        %p186 = pneg %p51
        %p187 = scmp.lt.s32.totalorder %s24, 0
        %s188 = scalar_select %p187, %s24, 0
        %s189 = scalar_lea.vmem %s1, %s188
        %p190 = pneg %p80
        %p191 = pneg %p77
        %p192 = pneg %p108
        %p193 = pneg %p105
        %s194 = sand.u32 %s95, 1
        %s195 = scalar_lea.sflag [#allocation4], %s194
        %s196 = sand.u32 %s95, 1
        %s197 = smul.addr %s196, 104
        %s198 = scalar_lea.vmem [#allocation5], %s197
        %s199 = smul.u32 13, %s23
        %s200 = ssub.s32 25, %s199
        %p201 = scmp.lt.s32.totalorder %s200, 13
        %s202 = scalar_select %p201, %s200, 13
        %s203 = smul.u32 8, %s202
        %p204 = scmp.lt.s32.totalorder %s24, 0
        %s205 = scalar_select %p204, %s24, 0
        %s206 = scalar_lea.vmem %s1, %s205
        %s207 = smul.u32 13, %s23
        %s208 = ssub.s32 25, %s207
        %p209 = scmp.lt.s32.totalorder %s208, 13
        %s210 = scalar_select %p209, %s208, 13
        %s211 = smul.u32 8, %s210
        %v212 = vld [vmem:[%s174] sm:$0xff]
        %v213 = vld [vmem:[%s174 + $0x8] sm:$0xff]
        %v214 = vld [vmem:[%s174 + $0x10] sm:$0xff]
        %v215 = vld [vmem:[%s174 + $0x18] sm:$0xff]
        %v216 = vld [vmem:[%s174 + $0x20] sm:$0xff]
        %v217 = vld [vmem:[%s174 + $0x28] sm:$0xff]
        %v218 = vld [vmem:[%s174 + $0x30] sm:$0xff]
        %v219 = vld [vmem:[%s174 + $0x38] sm:$0xff]
        %v220 = vld [vmem:[%s174 + $0x40] sm:$0xff]
        %v221 = vld [vmem:[%s174 + $0x48] sm:$0xff]
        %v222 = vld [vmem:[%s174 + $0x50] sm:$0xff]
        %v223 = vld [vmem:[%s174 + $0x58] sm:$0xff]
        %v224 = vld [vmem:[%s174 + $0x60] sm:$0xff]
        %v225 = vld [vmem:[%s206] sm:$0x1]
        %vm226 = vcmp.ne.s32.totalorder %v225, 0
        %v227 = vsel %vm226, 1, 0
        %v228 = vperm.slane %v227, 0
        %vm229 = vcmp.eq.s32.totalorder %v228, 1
        %v230 = vsel %vm229, 0.0, %v212
        %v231 = vsel %vm229, 0.0, %v213
        %v232 = vsel %vm229, 0.0, %v214
        %v233 = vsel %vm229, 0.0, %v215
        %v234 = vsel %vm229, 0.0, %v216
        %v235 = vsel %vm229, 0.0, %v217
        %v236 = vsel %vm229, 0.0, %v218
        %v237 = vsel %vm229, 0.0, %v219
        %v238 = vsel %vm229, 0.0, %v220
        %v239 = vsel %vm229, 0.0, %v221
        %v240 = vsel %vm229, 0.0, %v222
        %v241 = vsel %vm229, 0.0, %v223
        %v242 = vsel %vm229, 0.0, %v224
        %243 = vst [vmem:[%s198] sm:$0xff] %v230
        %244 = vst [vmem:[%s198 + $0x8] sm:$0xff] %v231
        %245 = vst [vmem:[%s198 + $0x10] sm:$0xff] %v232
        %246 = vst [vmem:[%s198 + $0x18] sm:$0xff] %v233
        %247 = vst [vmem:[%s198 + $0x20] sm:$0xff] %v234
        %248 = vst [vmem:[%s198 + $0x28] sm:$0xff] %v235
        %249 = vst [vmem:[%s198 + $0x30] sm:$0xff] %v236
        %250 = vst [vmem:[%s198 + $0x38] sm:$0xff] %v237
        %251 = vst [vmem:[%s198 + $0x40] sm:$0xff] %v238
        %252 = vst [vmem:[%s198 + $0x48] sm:$0xff] %v239
        %253 = vst [vmem:[%s198 + $0x50] sm:$0xff] %v240
        %254 = vst [vmem:[%s198 + $0x58] sm:$0xff] %v241
        %255 = vst [vmem:[%s198 + $0x60] sm:$0xff] %v242
        %s256 = sand.u32 %s95, 1
        %s257 = scalar_lea.sflag [#allocation4], %s256
        %s258 = sand.u32 %s95, 1
        %s259 = smul.addr %s258, 104
        %s260 = scalar_lea.vmem [#allocation5], %s259
        // Predicated region
        $region33: #{tpu_custom_call.1} parent=27 // pred_check
          %p261 = pneg %p105
        $region34: #{tpu_custom_call.1} parent=27 // pred_check_branch
          %263 = sbr.rel (%p261) target = $region36
        $region35: #{tpu_custom_call.1} parent=27 // pred_region
          %s264 = smul.u32 13, %s23
          %s265 = ssub.s32 25, %s264
          %p266 = scmp.lt.s32.totalorder %s265, 13
          %s267 = scalar_select %p266, %s265, 13
          %s268 = smul.u32 8, %s267
          %s269 = ssub.s32 104, %s268
          %s270 = sshll.u32 %s269, 4
          %271 = vsyncadd %s257, %s270
          %p272 = scmp.ne.s32.totalorder 0, %s268
          %s273 = sadd.s32 %s24, %s264
          %s274 = smul.addr %s273, 8
          %s275 = scalar_lea.hbm %s2, %s274
          %s276 = smul.u32 8, %s267
          %s277 = sshll.u32 %s260, 4
          %s278 = int_to_ptr.vmem [resolvable:$true] %s277
          %s279 = sshll.u32 %s275, 4
          %s280 = int_to_ptr.hbm [resolvable:$true] %s279
          %s281 = sshll.u32 %s276, 4
          %285 = dma.vmem_to_hbm [thread:$0]  (%p272), %s278, %s281, %s280, %s257, 128, 128, 8
        $region36: #{tpu_custom_call.1} parent=27 // pred_fallthru
          _
      $region28: #{tpu_custom_call.1} parent=5 // pred_fallthru
        _
      %p286 = scmp.le.s32.totalorder 2, %s14
      // Predicated region
      $region37: #{tpu_custom_call.1} parent=5 // pred_check
        %p287 = pneg %p286
      $region38: #{tpu_custom_call.1} parent=5 // pred_check_branch
        %289 = sbr.rel (%p287) target = $region40
      $region39: #{tpu_custom_call.1} parent=5 // pred_region
        %s290 = ssub.s32 %s14, 2
        // Predicated region
        $region41: #{tpu_custom_call.1} parent=39 // pred_check
          %p291 = pneg %p111
        $region42: #{tpu_custom_call.1} parent=39 // pred_check_branch
          %293 = sbr.rel (%p291) target = $region44
        $region43: #{tpu_custom_call.1} parent=39 // pred_region
          %s294 = sand.u32 %s96, 1
          %s295 = scalar_lea.sflag [#allocation4], %s294
          %s296 = sand.u32 %s96, 1
          %s297 = smul.addr %s296, 104
          %s298 = scalar_lea.vmem [#allocation5], %s297
          %300 = dma.done %s295, 1664
        $region44: #{tpu_custom_call.1} parent=39 // pred_fallthru
          _
      $region40: #{tpu_custom_call.1} parent=5 // pred_fallthru
        _
    $region6: #{tpu_custom_call.1} parent=1 // loop_footer
      %s18 = sadd.s32 1, %s14
    $region7: #{tpu_custom_call.1} parent=1 // loop_footer_branch
      %13 = sbr.rel target = $region3
    $region8: #{tpu_custom_call.1} parent=1 // loop_exit
      _
    %301 = vsyncpa [#allocation3], 1
    %s302 = scalar_lea.sflag [#allocation3], 1
    %303 = vsyncpa %s302, 1
    %304 = vsyncpa [#allocation4], 1
    %s305 = scalar_lea.sflag [#allocation4], 1
    %306 = vsyncpa %s305, 1

</llo_original>
